<compile_context>
chip_gen: v7x
topology: tpu7x:2x2x1
jax: 0.10.0
libtpu: 0.0.40
codegen_flags: <defaults>
</compile_context>

<pallas_src>
import functools
import math

import numpy as np
import jax
import jax.numpy as jnp
from jax.experimental import pallas as pl
from jax.experimental.pallas import tpu as pltpu

_LANE = 128
_SUBLANE = 8


def _round_up(x: int, m: int) -> int:
    return ((x + m - 1) // m) * m


def _vmem_capacity_bytes() -> int:
    try:
        return int(pltpu.get_tpu_info().vmem_capacity_bytes)
    except Exception:
        return 64 << 20  # conservative (v7x-like) default


def _select_tiles(n: int, vmem_bytes: int):
    """Per-generation A-tile sizes: larger on v5e/v6e (128 MiB VMEM), smaller on v7x."""
    if vmem_bytes >= (100 << 20):
        tm_t, tk_t = 512, 1024
    else:
        tm_t, tk_t = 256, 512
    tk = min(tk_t, max(_LANE, pl.next_power_of_2(int(n))))
    tm = min(tm_t, tk)  # tm divides tk -> both divide n_pad
    return tm, tk


# ----------------------------------------------------------------------------
# Pallas kernel: one tiled, block-sparse LightGCNConv layer (A @ E)
# ----------------------------------------------------------------------------
def _lightgcn_layer_kernel(counts_ref, kidx_ref, a_ref, e_ref, o_ref, acc_ref):
    """O[i] = sum over nonzero k-blocks of A[i, kidx[i,k]] @ E[kidx[i,k]].

    counts_ref: [n_row_blocks]        int32 (SMEM) nonzero k-block count per row block
    kidx_ref:   [n_row_blocks, max_k] int32 (SMEM) nonzero k-block indices (padded w/ repeats)
    a_ref:      [TM, TK]   bf16 VMEM tile of the normalized adjacency
    e_ref:      [TK, Dpad] bf16 VMEM tile of the current layer embeddings
    o_ref:      [TM, Dpad] f32  output tile
    acc_ref:    [TM, Dpad] f32  VMEM scratch accumulator (resident across k axis)
    """
    i = pl.program_id(0)
    k = pl.program_id(1)

    @pl.when(k == 0)
    def _():
        acc_ref[...] = jnp.zeros_like(acc_ref)

    # Skip compute for the padded (repeated-index) k slots of sparse row blocks.
    # The repeated block index also means the pipeline does not re-DMA A/E tiles.
    @pl.when(k < counts_ref[i])
    def _():
        acc_ref[...] += jnp.dot(a_ref[...], e_ref[...],
                                preferred_element_type=jnp.float32)

    @pl.when(k == pl.num_programs(1) - 1)
    def _():
        o_ref[...] = acc_ref[...]


def _make_layer_fn(n_pad: int, d_pad: int, tm: int, tk: int, max_k: int,
                   vmem_cap: int):
    n_i = n_pad // tm
    grid = (n_i, max_k)

    a_spec = pl.BlockSpec((tm, tk), lambda i, k, counts, kidx: (i, kidx[i, k]))
    e_spec = pl.BlockSpec((tk, d_pad), lambda i, k, counts, kidx: (kidx[i, k], 0))
    o_spec = pl.BlockSpec((tm, d_pad), lambda i, k, counts, kidx: (i, 0))

    # Double-buffered tile footprint + headroom, clamped below 3/4 of physical VMEM.
    need = (2 * tm * tk * 2          # A tiles (bf16, double-buffered)
            + 2 * tk * d_pad * 2     # E tiles (bf16)
            + 2 * tm * d_pad * 4     # output tiles (f32)
            + tm * d_pad * 4)        # accumulator scratch
    vmem_limit = int(min(max(need + (8 << 20), 32 << 20), (vmem_cap * 3) // 4))

    return pl.pallas_call(
        _lightgcn_layer_kernel,
        out_shape=jax.ShapeDtypeStruct((n_pad, d_pad), jnp.float32),
        grid_spec=pltpu.PrefetchScalarGridSpec(
            num_scalar_prefetch=2,
            grid=grid,
            in_specs=[a_spec, e_spec],
            out_specs=o_spec,
            scratch_shapes=[pltpu.VMEM((tm, d_pad), jnp.float32)],
        ),
        compiler_params=pltpu.CompilerParams(
            dimension_semantics=("parallel", "arbitrary"),
            vmem_limit_bytes=vmem_limit,
        ),
    )


# ----------------------------------------------------------------------------
# Host-side helpers: normalized adjacency, block-sparsity structure, padding
# ----------------------------------------------------------------------------
def build_norm_adj(edge_index, num_nodes, edge_weight=None):
    """Dense symmetric-normalized adjacency matching LightGCNConv.forward:
    out[i] = sum_{e=(r,c), c==i} deg^-1/2[r] * deg^-1/2[c] * (w_e) * x[r],
    with deg = in-degree from edge_index[1] (targets), unweighted.
    """
    row = edge_index[0]
    col = edge_index[1]
    deg = jnp.zeros((num_nodes,), jnp.float32).at[col].add(1.0)
    deg_inv_sqrt = jnp.where(deg > 0.0, deg ** -0.5, 0.0)  # inf -> 0
    norm = deg_inv_sqrt[row] * deg_inv_sqrt[col]
    if edge_weight is not None:
        norm = norm * edge_weight.astype(jnp.float32)
    a = jnp.zeros((num_nodes, num_nodes), jnp.float32).at[col, row].add(norm)
    return a


def build_block_structure(a_pad, tm, tk):
    """Per-row-block nonzero k-block indices (host-side, from the padded dense A)."""
    a_np = np.asarray(a_pad)
    n_pad = a_np.shape[0]
    n_i, n_k = n_pad // tm, n_pad // tk
    nz = (a_np.reshape(n_i, tm, n_k, tk) != 0.0).any(axis=(1, 3))  # [n_i, n_k]
    counts = nz.sum(axis=1).astype(np.int32)
    max_k = max(int(counts.max()), 1)
    kidx = np.zeros((n_i, max_k), dtype=np.int32)
    for i in range(n_i):
        ks = np.nonzero(nz[i])[0].astype(np.int32)
        if ks.size:
            kidx[i, :ks.size] = ks
            kidx[i, ks.size:] = ks[-1]   # repeat last valid block -> no extra DMA
    return jnp.asarray(counts), jnp.asarray(kidx)


def lightgcn_propagate(a_norm, emb0, n_layers, tile_m=None, tile_k=None):
    """Runs n_layers of tiled A @ E plus the mean over layer outputs."""
    n, d = emb0.shape
    assert a_norm.shape == (n, n)
    assert n_layers >= 0

    vmem_cap = _vmem_capacity_bytes()
    if tile_m is None or tile_k is None:
        tm, tk = _select_tiles(n, vmem_cap)
    else:
        tm, tk = int(tile_m), int(tile_k)
    assert tm % _SUBLANE == 0 and tk % _LANE == 0, "tile constraints: TM%8==0, TK%128==0"

    d_pad = _round_up(d, _LANE)                                  # lane-dense output
    n_pad = _round_up(n, (tm * tk) // math.gcd(tm, tk))          # divisible by TM and TK

    a_pad = jnp.pad(a_norm.astype(jnp.float32), ((0, n_pad - n), (0, n_pad - n)))
    e_pad = jnp.pad(emb0.astype(jnp.float32), ((0, n_pad - n), (0, d_pad - d)))

    counts, kidx = build_block_structure(a_pad, tm, tk)
    a_bf16 = a_pad.astype(jnp.bfloat16)  # A is the HBM-bound operand -> bf16

    layer_fn = _make_layer_fn(n_pad, d_pad, tm, tk, int(kidx.shape[1]), vmem_cap)

    e = e_pad
    acc = e_pad
    for _ in range(n_layers):
        e = layer_fn(counts, kidx, a_bf16, e.astype(jnp.bfloat16))
        # dropout(eval) == identity between layers
        acc = acc + e
    final = acc * (1.0 / float(n_layers + 1))
    return final[:n, :d]


# ----------------------------------------------------------------------------
# Model glue (plain JAX): parameter init and forward
# ----------------------------------------------------------------------------
def xavier_uniform(key, shape):
    # nn.init.xavier_uniform_ on an [fan_out, fan_in] tensor
    fan_out, fan_in = shape
    bound = (6.0 / (fan_in + fan_out)) ** 0.5
    return jax.random.uniform(key, shape, jnp.float32, -bound, bound)


class LightGCNPallas:
    def __init__(self, n_users, n_items, embedding_dim=64, n_layers=3, dropout=0.1,
                 key=jax.random.PRNGKey(0)):
        self.n_users = n_users
        self.n_items = n_items
        self.embedding_dim = embedding_dim
        self.n_layers = n_layers
        k_u, k_i = jax.random.split(key)
        self.user_embedding = xavier_uniform(k_u, (n_users, embedding_dim))
        self.item_embedding = xavier_uniform(k_i, (n_items, embedding_dim))

    def forward(self, edge_index, edge_weight=None, tile_m=None, tile_k=None):
        all_emb = jnp.concatenate([self.user_embedding, self.item_embedding], axis=0)
        num_nodes = self.n_users + self.n_items
        a_norm = build_norm_adj(edge_index, num_nodes, edge_weight)
        final_emb = lightgcn_propagate(a_norm, all_emb, self.n_layers,
                                       tile_m=tile_m, tile_k=tile_k)
        user_embeddings = final_emb[: self.n_users]
        item_embeddings = final_emb[self.n_users:]
        return user_embeddings, item_embeddings


# ----------------------------------------------------------------------------
# Demo / smoke test
# ----------------------------------------------------------------------------
if __name__ == "__main__":
    n_users, n_items, emb_dim, n_layers = 100, 180, 64, 3
    num_nodes = n_users + n_items

    # Deterministic bipartite user-item interaction graph (both directions).
    key = jax.random.PRNGKey(0)
    src_list, dst_list = [], []
    for u in range(n_users):
        for j in range(3):  # each user interacts with 3 items
            it = (u * 7 + j * 5) % n_items
            u_node = u
            i_node = n_users + it
            src_list += [u_node, i_node]
            dst_list += [i_node, u_node]
    edge_index = jnp.array([src_list, dst_list], dtype=jnp.int32)  # [2, num_edges]
    edge_weight = None  # optional; pass a [num_edges] f32 array to use it

    model = LightGCNPallas(n_users, n_items, embedding_dim=emb_dim,
                           n_layers=n_layers, key=key)

    # Small tiles for the demo so the grid / k-reduction / block-skip paths are
    # all exercised (auto tile selection kicks in when tile_m/tile_k are None).
    user_embeddings, item_embeddings = model.forward(
        edge_index, edge_weight, tile_m=64, tile_k=128)
    jax.block_until_ready((user_embeddings, item_embeddings))

    # Sanity check against a pure-JAX f32 reference of the same math.
    a_ref = build_norm_adj(edge_index, num_nodes, edge_weight)
    e = jnp.concatenate([model.user_embedding, model.item_embedding], axis=0)
    layers = [e]
    cur = e
    for _ in range(n_layers):
        cur = a_ref @ cur
        layers.append(cur)
    ref_final = jnp.stack(layers, axis=0).mean(axis=0)
    ref_users, ref_items = ref_final[:n_users], ref_final[n_users:]

    def rel_err(got, ref):
        return float(jnp.linalg.norm(got - ref) / (jnp.linalg.norm(ref) + 1e-12))

    # Kernel uses bf16 A/E with f32 accumulation -> allow ~1% relative error.
    assert rel_err(user_embeddings, ref_users) < 2e-2
    assert rel_err(item_embeddings, ref_items) < 2e-2

    print("KERNEL_OK")
</pallas_src>

<mosaic_0001>
module attributes {stable_mosaic.version = 11 : i64} {
  func.func @_lightgcn_layer_kernel(%arg0: i32, %arg1: i32, %arg2: memref<6xi32, #tpu.memory_space<smem>>, %arg3: memref<6x3xi32, #tpu.memory_space<smem>>, %arg4: memref<64x128xbf16, #tpu.memory_space<vmem>>, %arg5: memref<128x128xbf16, #tpu.memory_space<vmem>>, %arg6: memref<64x128xf32, #tpu.memory_space<vmem>>, %arg7: memref<64x128xf32, #tpu.memory_space<vmem>>) attributes {dimension_semantics = [#tpu.dimension_semantics<parallel>, #tpu.dimension_semantics<arbitrary>], iteration_bounds = array<i64: 6, 3>, scalar_prefetch = 2 : i64, scratch_operands = 1 : i64, tpu.core_type = #tpu.core_type<tc>, window_params = [{transform_indices = @transform_0, window_bounds = array<i64: 64, 128>}, {transform_indices = @transform_1, window_bounds = array<i64: 128, 128>}, {transform_indices = @transform_2, window_bounds = array<i64: 64, 128>}]} {
    %c0_i32 = arith.constant 0 : i32
    %0 = arith.cmpi eq, %arg1, %c0_i32 : i32
    %1 = arith.extui %0 : i1 to i32
    %c0_i32_0 = arith.constant 0 : i32
    %2 = arith.cmpi ne, %1, %c0_i32_0 : i32
    scf.if %2 {
      %cst = arith.constant 0.000000e+00 : f32
      %11 = vector.broadcast %cst : f32 to vector<64x128xf32>
      %c0 = arith.constant 0 : index
      %c0_3 = arith.constant 0 : index
      %12 = vector.load %arg7[%c0, %c0_3] : memref<64x128xf32, #tpu.memory_space<vmem>>, vector<64x128xf32>
      tpu.vector_store %arg7[%c0, %c0_3], %11 {strides = array<i32>} : memref<64x128xf32, #tpu.memory_space<vmem>>, vector<64x128xf32>,
    } else {
    }
    %3 = arith.index_cast %arg0 : i32 to index
    %4 = memref.load %arg2[%3] : memref<6xi32, #tpu.memory_space<smem>>
    %5 = arith.cmpi slt, %arg1, %4 : i32
    %6 = arith.extui %5 : i1 to i32
    %c0_i32_1 = arith.constant 0 : i32
    %7 = arith.cmpi ne, %6, %c0_i32_1 : i32
    scf.if %7 {
      %c0 = arith.constant 0 : index
      %c0_3 = arith.constant 0 : index
      %11 = vector.load %arg7[%c0, %c0_3] : memref<64x128xf32, #tpu.memory_space<vmem>>, vector<64x128xf32>
      %c0_4 = arith.constant 0 : index
      %c0_5 = arith.constant 0 : index
      %12 = vector.load %arg4[%c0_4, %c0_5] : memref<64x128xbf16, #tpu.memory_space<vmem>>, vector<64x128xbf16>
      %c0_6 = arith.constant 0 : index
      %c0_7 = arith.constant 0 : index
      %13 = vector.load %arg5[%c0_6, %c0_7] : memref<128x128xbf16, #tpu.memory_space<vmem>>, vector<128x128xbf16>
      %cst = arith.constant dense<0.000000e+00> : vector<64x128xf32>
      %14 = tpu.matmul %12, %13, %cst {dimension_numbers = #tpu.dot_dimension_numbers<[1], [0], [0], [1], [0, 0, 1, 1], [], []>} : vector<64x128xbf16>, vector<128x128xbf16>, vector<64x128xf32> -> vector<64x128xf32>
      %15 = arith.addf %11, %14 : vector<64x128xf32>
      %c0_8 = arith.constant 0 : index
      %c0_9 = arith.constant 0 : index
      %16 = vector.load %arg7[%c0_8, %c0_9] : memref<64x128xf32, #tpu.memory_space<vmem>>, vector<64x128xf32>
      tpu.vector_store %arg7[%c0_8, %c0_9], %15 {strides = array<i32>} : memref<64x128xf32, #tpu.memory_space<vmem>>, vector<64x128xf32>,
    } else {
    }
    %c2_i32 = arith.constant 2 : i32
    %8 = arith.cmpi eq, %arg1, %c2_i32 : i32
    %9 = arith.extui %8 : i1 to i32
    %c0_i32_2 = arith.constant 0 : i32
    %10 = arith.cmpi ne, %9, %c0_i32_2 : i32
    scf.if %10 {
      %c0 = arith.constant 0 : index
      %c0_3 = arith.constant 0 : index
      %11 = vector.load %arg7[%c0, %c0_3] : memref<64x128xf32, #tpu.memory_space<vmem>>, vector<64x128xf32>
      %c0_4 = arith.constant 0 : index
      %c0_5 = arith.constant 0 : index
      %12 = vector.load %arg6[%c0_4, %c0_5] : memref<64x128xf32, #tpu.memory_space<vmem>>, vector<64x128xf32>
      tpu.vector_store %arg6[%c0_4, %c0_5], %11 {strides = array<i32>} : memref<64x128xf32, #tpu.memory_space<vmem>>, vector<64x128xf32>,
    } else {
    }
    return
  }
  func.func @transform_0(%arg0: i32, %arg1: i32, %arg2: memref<6xi32, #tpu.memory_space<smem>>, %arg3: memref<6x3xi32, #tpu.memory_space<smem>>) -> (i32, i32) {
    %0 = arith.index_cast %arg0 : i32 to index
    %1 = arith.index_cast %arg1 : i32 to index
    %2 = memref.load %arg3[%0, %1] : memref<6x3xi32, #tpu.memory_space<smem>>
    %c0_i32 = arith.constant 0 : i32
    return %arg0, %2 : i32, i32
  }
  func.func @transform_1(%arg0: i32, %arg1: i32, %arg2: memref<6xi32, #tpu.memory_space<smem>>, %arg3: memref<6x3xi32, #tpu.memory_space<smem>>) -> (i32, i32) {
    %0 = arith.index_cast %arg0 : i32 to index
    %1 = arith.index_cast %arg1 : i32 to index
    %2 = memref.load %arg3[%0, %1] : memref<6x3xi32, #tpu.memory_space<smem>>
    %c0_i32 = arith.constant 0 : i32
    %c0_i32_0 = arith.constant 0 : i32
    return %2, %c0_i32 : i32, i32
  }
  func.func @transform_2(%arg0: i32, %arg1: i32, %arg2: memref<6xi32, #tpu.memory_space<smem>>, %arg3: memref<6x3xi32, #tpu.memory_space<smem>>) -> (i32, i32) {
    %c0_i32 = arith.constant 0 : i32
    %c0_i32_0 = arith.constant 0 : i32
    return %arg0, %c0_i32 : i32, i32
  }
}

</mosaic_0001>

<llo_original>
// kernel: tpu_custom_call.1
$region0: #{tpu_custom_call.1}
  #allocation0 [shape = 'u32[]', space=smem, size = 0x4, offset = 0x4, fixed_abs, tag = 'smem constant byte address 0x4 - core index']
  #allocation1 [shape = 'u32[144,128]{1,0:T(1,128)}', space=vmem, size = 0x12000, scoped, tag = 'internal scratch']
  #allocation2 [shape = 'f32[64,128]{1,0:T(8,128)}', space=vmem, size = 0x8000, scoped, tag = 'scratch operand']
  #allocation3 [shape = 's32[1]{0}', space=sflag, size = 0x4, scoped, tag = 'scoped memory for tpu_custom_call.1']
  #allocation4 [shape = 'u8[512]{0}', space=smem, size = 0x200, scoped, tag = 'prefetched SMEM operand 0']
  #allocation5 [shape = 'u8[4096]{0}', space=smem, size = 0x1000, scoped, tag = 'prefetched SMEM operand 1']
  %s0 = inlined_call_operand.vmem [shape: s32[6], index: 0, kind: input, shape index: {}]
  %s1 = inlined_call_operand.vmem [shape: s32[6,3], index: 1, kind: input, shape index: {}]
  %s2 = inlined_call_operand.hbm [shape: bf16[384,384], index: 2, kind: input, shape index: {}]
  %s3 = inlined_call_operand.hbm [shape: bf16[384,128], index: 3, kind: input, shape index: {}]
  %s4 = inlined_call_operand.hbm [shape: f32[384,128], index: 4, kind: output, shape index: {}]
  %s5 = sld [smem:[#allocation0]]
  $region61: #{tpu_custom_call.1} parent=0
    _
  %s7 = ssub.s32 1, %s5
  %s8 = scalar_select 0, %s7, %s5
  %s9 = sshll.u32 %s0, 4
  %s10 = int_to_ptr.vmem [resolvable:$true] %s9
  %12 = dma.vmem_to_smem %s10, 16, [#allocation4], [#allocation3]
  %s13 = sshll.u32 %s1, 4
  %s14 = int_to_ptr.vmem [resolvable:$true] %s13
  %16 = dma.vmem_to_smem %s14, 128, [#allocation5], [#allocation3]
  %17 = dma.done [#allocation3], 144
  %18 = sfence
  $region1: #{tpu_custom_call.1} parent=0
    #allocation6 [shape = 'u8[32768]{0}', space=vmem, size = 0x8000, scoped, tag = 'input window, operand 2']
    #allocation7 [shape = 's32[2]{0}', space=sflag, size = 0x8, scoped, tag = 'scoped memory for tpu_custom_call.1']
    #allocation8 [shape = 's32[2]{0}', space=sflag, size = 0x8, scoped, tag = 'scoped memory for tpu_custom_call.1']
    #allocation9 [shape = 'u8[65536]{0}', space=vmem, size = 0x10000, scoped, tag = 'input window, operand 3']
    #allocation10 [shape = 's32[2]{0}', space=sflag, size = 0x8, scoped, tag = 'scoped memory for tpu_custom_call.1']
    #allocation11 [shape = 'u8[65536]{0}', space=vmem, size = 0x10000, scoped, tag = 'output window, operand 0']
    %19 = vsyncpa [#allocation7], 0
    %s20 = scalar_lea.sflag [#allocation7], 1
    %21 = vsyncpa %s20, 0
    %22 = vsyncpa [#allocation10], 0
    %s23 = scalar_lea.sflag [#allocation10], 1
    %24 = vsyncpa %s23, 0
    %25 = vsyncpa [#allocation8], 0
    %s26 = scalar_lea.sflag [#allocation8], 1
    %27 = vsyncpa %s26, 0
    loop: start=0, step=1, limit=20
    $region2: #{tpu_custom_call.1} parent=1 // loop_pre_header
      _
    $region3: #{tpu_custom_call.1} parent=1 // loop_header
      %s29 = sphi 0, %s33
      %p30 = scmp.ge.s32.totalorder %s29, 20
      %s36 = sphi 0, %s48
      %s37 = sphi 0, %s44
      %s38 = sphi 0, %s36
      %s39 = sphi 0, %s37
      %s40 = sphi 0, %s38
      %s41 = sphi 0, %s39
      %s69 = sphi 0, %s71
      %s72 = sphi 0, %s69
      %s73 = sphi 0, %s72
      %s89 = sphi 0, %s73
      %s111 = sphi 0, %s113
      %s114 = sphi 0, %s111
      %s115 = sphi 0, %s114
      %s131 = sphi 0, %s115
      %s137 = sphi 0, %s139
      %s140 = sphi 0, %s137
      %s141 = sphi 0, %s140
      %s157 = sphi 0, %s141
    $region4: #{tpu_custom_call.1} parent=1 // loop_header_branch
      %32 = sbr.rel (%p30) target = $region8
    $region5: #{tpu_custom_call.1} parent=1 // loop_body
      %s34 = ssub.s32 %s29, 1
      %s35 = ssub.s32 %s29, 2
      %s42 = sadd.s32 1, %s37
      %p43 = scmp.ge.s32.totalorder %s42, 3
      %s44 = scalar_select %p43, 0, %s42
      %s45 = sadd.s32 1, %s36
      %s46 = scalar_select %p43, %s45, %s36
      %p47 = scmp.ge.s32.totalorder %s46, 6
      %s48 = scalar_select %p47, 0, %s46
      %s49 = sshra.s32 %s37, 7
      %s50 = sand.u32 %s37, 127
      %s51 = sadd.s32 %s49, %s36
      %s52 = smul.u32 %s51, 128
      %s53 = sshra.s32 %s37, 7
      %s54 = sand.u32 %s37, 127
      %s55 = sadd.s32 %s52, %s54
      %s56 = sld [smem:[#allocation5 + %s55]]
      %s57 = sshra.s32 %s44, 7
      %s58 = sand.u32 %s44, 127
      %s59 = sadd.s32 %s57, %s48
      %s60 = smul.u32 %s59, 128
      %s61 = sshra.s32 %s44, 7
      %s62 = sand.u32 %s44, 127
      %s63 = sadd.s32 %s60, %s62
      %s64 = sld [smem:[#allocation5 + %s63]]
      %s65 = ssub.s32 %s36, %s48
      %s66 = ssub.s32 %s56, %s64
      %s67 = sor.u32 %s65, %s66
      %p68 = scmp.eq.s32.totalorder %s67, 0
      %s70 = sadd.s32 %s69, 1
      %s71 = scalar_select %p68, %s69, %s70
      %p74 = pneg %p68
      %p75 = scmp.eq.s32.totalorder %s29, 17
      %p76 = por %p74, %p75
      %p77 = scmp.ne.s32.totalorder %s69, %s72
      %p78 = scmp.eq.s32.totalorder %s29, 0
      %p79 = por %p77, %p78
      %p80 = scmp.ne.s32.totalorder %s69, %s72
      %p81 = scmp.eq.s32.totalorder %s34, 17
      %p82 = por %p80, %p81
      %p83 = scmp.ne.s32.totalorder %s72, %s73
      %p84 = scmp.eq.s32.totalorder %s34, 0
      %p85 = por %p83, %p84
      %p86 = scmp.ne.s32.totalorder %s72, %s73
      %p87 = scmp.eq.s32.totalorder %s35, 17
      %p88 = por %p86, %p87
      %p90 = scmp.ne.s32.totalorder %s73, %s89
      %p91 = scmp.eq.s32.totalorder %s35, 0
      %p92 = por %p90, %p91
      %s93 = sshra.s32 %s37, 7
      %s94 = sand.u32 %s37, 127
      %s95 = sadd.s32 %s93, %s36
      %s96 = smul.u32 %s95, 128
      %s97 = sshra.s32 %s37, 7
      %s98 = sand.u32 %s37, 127
      %s99 = sadd.s32 %s96, %s98
      %s100 = sld [smem:[#allocation5 + %s99]]
      %s101 = sshra.s32 %s44, 7
      %s102 = sand.u32 %s44, 127
      %s103 = sadd.s32 %s101, %s48
      %s104 = smul.u32 %s103, 128
      %s105 = sshra.s32 %s44, 7
      %s106 = sand.u32 %s44, 127
      %s107 = sadd.s32 %s104, %s106
      %s108 = sld [smem:[#allocation5 + %s107]]
      %s109 = ssub.s32 %s100, %s108
      %p110 = scmp.eq.s32.totalorder %s109, 0
      %s112 = sadd.s32 %s111, 1
      %s113 = scalar_select %p110, %s111, %s112
      %p116 = pneg %p110
      %p117 = scmp.eq.s32.totalorder %s29, 17
      %p118 = por %p116, %p117
      %p119 = scmp.ne.s32.totalorder %s111, %s114
      %p120 = scmp.eq.s32.totalorder %s29, 0
      %p121 = por %p119, %p120
      %p122 = scmp.ne.s32.totalorder %s111, %s114
      %p123 = scmp.eq.s32.totalorder %s34, 17
      %p124 = por %p122, %p123
      %p125 = scmp.ne.s32.totalorder %s114, %s115
      %p126 = scmp.eq.s32.totalorder %s34, 0
      %p127 = por %p125, %p126
      %p128 = scmp.ne.s32.totalorder %s114, %s115
      %p129 = scmp.eq.s32.totalorder %s35, 17
      %p130 = por %p128, %p129
      %p132 = scmp.ne.s32.totalorder %s115, %s131
      %p133 = scmp.eq.s32.totalorder %s35, 0
      %p134 = por %p132, %p133
      %s135 = ssub.s32 %s36, %s48
      %p136 = scmp.eq.s32.totalorder %s135, 0
      %s138 = sadd.s32 %s137, 1
      %s139 = scalar_select %p136, %s137, %s138
      %p142 = pneg %p136
      %p143 = scmp.eq.s32.totalorder %s29, 17
      %p144 = por %p142, %p143
      %p145 = scmp.ne.s32.totalorder %s137, %s140
      %p146 = scmp.eq.s32.totalorder %s29, 0
      %p147 = por %p145, %p146
      %p148 = scmp.ne.s32.totalorder %s137, %s140
      %p149 = scmp.eq.s32.totalorder %s34, 17
      %p150 = por %p148, %p149
      %p151 = scmp.ne.s32.totalorder %s140, %s141
      %p152 = scmp.eq.s32.totalorder %s34, 0
      %p153 = por %p151, %p152
      %p154 = scmp.ne.s32.totalorder %s140, %s141
      %p155 = scmp.eq.s32.totalorder %s35, 17
      %p156 = por %p154, %p155
      %p158 = scmp.ne.s32.totalorder %s141, %s157
      %p159 = scmp.eq.s32.totalorder %s35, 0
      %p160 = por %p158, %p159
      %p161 = scmp.le.s32.totalorder 1, %s29
      %p162 = scmp.lt.s32.totalorder %s29, 19
      %p163 = pnand %p161, %p162
      %p164 = pneg %p163
      // Predicated region
      $region9: #{tpu_custom_call.1} parent=5 // pred_check
        _
      $region10: #{tpu_custom_call.1} parent=5 // pred_check_branch
        %166 = sbr.rel (%p163) target = $region12
      $region11: #{tpu_custom_call.1} parent=5 // pred_region
        %s167 = ssub.s32 %s29, 1
      $region12: #{tpu_custom_call.1} parent=5 // pred_fallthru
        _
      %p168 = scmp.lt.s32.totalorder %s29, 18
      // Predicated region
      $region13: #{tpu_custom_call.1} parent=5 // pred_check
        %p169 = pneg %p168
      $region14: #{tpu_custom_call.1} parent=5 // pred_check_branch
        %171 = sbr.rel (%p169) target = $region16
      $region15: #{tpu_custom_call.1} parent=5 // pred_region
        // Predicated region
        $region17: #{tpu_custom_call.1} parent=15 // pred_check
          %p172 = pneg %p79
        $region18: #{tpu_custom_call.1} parent=15 // pred_check_branch
          %174 = sbr.rel (%p172) target = $region20
        $region19: #{tpu_custom_call.1} parent=15 // pred_region
          %s175 = sand.u32 %s69, 1
          %s176 = scalar_lea.sflag [#allocation7], %s175
          %s177 = sand.u32 %s69, 1
          %s178 = smul.addr %s177, 32
          %s179 = scalar_lea.vmem [#allocation6], %s178
          %s180 = sshra.s32 %s37, 7
          %s181 = sand.u32 %s37, 127
          %s182 = sadd.s32 %s180, %s36
          %s183 = smul.u32 %s182, 128
          %s184 = sshra.s32 %s37, 7
          %s185 = sand.u32 %s37, 127
          %s186 = sadd.s32 %s183, %s185
          %s187 = sld [smem:[#allocation5 + %s186]]
          %s188 = smul.u32 8, %s36
          %s190 = ssub.s32 512, 512
          %191 = vsyncadd %s176, %s190
          %s192 = smul.addr %s188, 3
          %s193 = sadd.s32 %s187, %s192
          %s194 = smul.addr %s193, 64
          %s195 = scalar_lea.hbm %s2, %s194
          %s196 = sshll.u32 %s179, 4
          %s197 = int_to_ptr.vmem [resolvable:$true] %s196
          %202 = dma.hbm_to_vmem [thread:$0]  %s195, 512, %s197, %s176, 192, 64, 4
        $region20: #{tpu_custom_call.1} parent=15 // pred_fallthru
          _
        // Predicated region
        $region21: #{tpu_custom_call.1} parent=15 // pred_check
          %p203 = pneg %p121
        $region22: #{tpu_custom_call.1} parent=15 // pred_check_branch
          %205 = sbr.rel (%p203) target = $region24
        $region23: #{tpu_custom_call.1} parent=15 // pred_region
          %s206 = sand.u32 %s111, 1
          %s207 = scalar_lea.sflag [#allocation10], %s206
          %s208 = sand.u32 %s111, 1
          %s209 = smul.addr %s208, 64
          %s210 = scalar_lea.vmem [#allocation9], %s209
          %s211 = sshra.s32 %s37, 7
          %s212 = sand.u32 %s37, 127
          %s213 = sadd.s32 %s211, %s36
          %s214 = smul.u32 %s213, 128
          %s215 = sshra.s32 %s37, 7
          %s216 = sand.u32 %s37, 127
          %s217 = sadd.s32 %s214, %s216
          %s218 = sld [smem:[#allocation5 + %s217]]
          %s219 = smul.u32 16, %s218
          %s221 = ssub.s32 1024, 1024
          %222 = vsyncadd %s207, %s221
          %s223 = smul.addr %s219, 64
          %s224 = scalar_lea.hbm %s3, %s223
          %s225 = sshll.u32 %s210, 4
          %s226 = int_to_ptr.vmem [resolvable:$true] %s225
          %231 = dma.hbm_to_vmem [thread:$0]  %s224, 1024, %s226, %s207, 64, 64, 4
        $region24: #{tpu_custom_call.1} parent=15 // pred_fallthru
          _
      $region16: #{tpu_custom_call.1} parent=5 // pred_fallthru
        _
      %p232 = scmp.le.s32.totalorder 1, %s29
      %p233 = scmp.lt.s32.totalorder %s29, 19
      %p234 = pnand %p232, %p233
      %p235 = pneg %p234
      // Predicated region
      $region25: #{tpu_custom_call.1} parent=5 // pred_check
        _
      $region26: #{tpu_custom_call.1} parent=5 // pred_check_branch
        %237 = sbr.rel (%p234) target = $region28
      $region27: #{tpu_custom_call.1} parent=5 // pred_region
        %s238 = ssub.s32 %s29, 1
        %s239 = sand.u32 %s72, 1
        %s240 = scalar_lea.sflag [#allocation7], %s239
        %s241 = sand.u32 %s72, 1
        %s242 = smul.addr %s241, 32
        %s243 = scalar_lea.vmem [#allocation6], %s242
        // Predicated region
        $region29: #{tpu_custom_call.1} parent=27 // pred_check
          %p244 = pneg %p85
        $region30: #{tpu_custom_call.1} parent=27 // pred_check_branch
          %246 = sbr.rel (%p244) target = $region32
        $region31: #{tpu_custom_call.1} parent=27 // pred_region
          %247 = dma.done %s240, 512
        $region32: #{tpu_custom_call.1} parent=27 // pred_fallthru
          _
        %s248 = sand.u32 %s114, 1
        %s249 = scalar_lea.sflag [#allocation10], %s248
        %s250 = sand.u32 %s114, 1
        %s251 = smul.addr %s250, 64
        %s252 = scalar_lea.vmem [#allocation9], %s251
        // Predicated region
        $region33: #{tpu_custom_call.1} parent=27 // pred_check
          %p253 = pneg %p127
        $region34: #{tpu_custom_call.1} parent=27 // pred_check_branch
          %255 = sbr.rel (%p253) target = $region36
        $region35: #{tpu_custom_call.1} parent=27 // pred_region
          %256 = dma.done %s249, 1024
        $region36: #{tpu_custom_call.1} parent=27 // pred_fallthru
          _
        %s257 = sand.u32 %s72, 1
        %s258 = scalar_lea.sflag [#allocation7], %s257
        %s259 = sand.u32 %s72, 1
        %s260 = smul.addr %s259, 32
        %s261 = scalar_lea.vmem [#allocation6], %s260
        %p262 = pneg %p85
        %p263 = pneg %p82
        %s264 = sand.u32 %s114, 1
        %s265 = scalar_lea.sflag [#allocation10], %s264
        %s266 = sand.u32 %s114, 1
        %s267 = smul.addr %s266, 64
        %s268 = scalar_lea.vmem [#allocation9], %s267
        %p269 = pneg %p127
        %p270 = pneg %p124
        %p271 = pneg %p153
        %p272 = pneg %p150
        %s273 = sand.u32 %s140, 1
        %s274 = scalar_lea.sflag [#allocation8], %s273
        %s275 = sand.u32 %s140, 1
        %s276 = smul.addr %s275, 64
        %s277 = scalar_lea.vmem [#allocation11], %s276
        %s278 = sshra.s32 %s39, 7
        %s279 = sand.u32 %s39, 127
        %s280 = sadd.s32 %s278, %s38
        %s281 = smul.u32 %s280, 128
        %s282 = sshra.s32 %s39, 7
        %s283 = sand.u32 %s39, 127
        %s284 = sadd.s32 %s281, %s283
        %s285 = sld [smem:[#allocation5 + %s284]]
        %s286 = smul.u32 8, %s38
        %s287 = sshra.s32 %s39, 7
        %s288 = sand.u32 %s39, 127
        %s289 = sadd.s32 %s287, %s38
        %s290 = smul.u32 %s289, 128
        %s291 = sshra.s32 %s39, 7
        %s292 = sand.u32 %s39, 127
        %s293 = sadd.s32 %s290, %s292
        %s294 = sld [smem:[#allocation5 + %s293]]
        %s295 = smul.u32 16, %s294
        %s296 = smul.u32 8, %s38
        %p298 = scmp.eq.s32.totalorder %s39, 0
        // Predicated region
        $region37: #{tpu_custom_call.1} parent=27 // pred_check
          %p299 = pneg %p298
        $region38: #{tpu_custom_call.1} parent=27 // pred_check_branch
          %301 = sbr.rel (%p299) target = $region40
        $region39: #{tpu_custom_call.1} parent=27 // pred_region
          %302 = vst [vmem:[#allocation2] sm:$0xff] 0.0
          %303 = vst [vmem:[#allocation2 + $0x8] sm:$0xff] 0.0
          %304 = vst [vmem:[#allocation2 + $0x10] sm:$0xff] 0.0
          %305 = vst [vmem:[#allocation2 + $0x18] sm:$0xff] 0.0
          %306 = vst [vmem:[#allocation2 + $0x20] sm:$0xff] 0.0
          %307 = vst [vmem:[#allocation2 + $0x28] sm:$0xff] 0.0
          %308 = vst [vmem:[#allocation2 + $0x30] sm:$0xff] 0.0
          %309 = vst [vmem:[#allocation2 + $0x38] sm:$0xff] 0.0
        $region40: #{tpu_custom_call.1} parent=27 // pred_fallthru
          _
        %s310 = sld [smem:[#allocation4 + %s38]]
        %p311 = scmp.lt.s32.totalorder %s39, %s310
        // Predicated region
        $region41: #{tpu_custom_call.1} parent=27 // pred_check
          %p312 = pneg %p311
        $region42: #{tpu_custom_call.1} parent=27 // pred_check_branch
          %314 = sbr.rel (%p312) target = $region44
        $region43: #{tpu_custom_call.1} parent=27 // pred_region
          %v315 = vld [vmem:[#allocation2] sm:$0xff]
          %v316 = vld [vmem:[#allocation2 + $0x8] sm:$0xff]
          %v317 = vld [vmem:[#allocation2 + $0x10] sm:$0xff]
          %v318 = vld [vmem:[#allocation2 + $0x18] sm:$0xff]
          %v319 = vld [vmem:[#allocation2 + $0x20] sm:$0xff]
          %v320 = vld [vmem:[#allocation2 + $0x28] sm:$0xff]
          %v321 = vld [vmem:[#allocation2 + $0x30] sm:$0xff]
          %v322 = vld [vmem:[#allocation2 + $0x38] sm:$0xff]
          %v323 = vld [vmem:[%s243] sm:$0xf]
          %v324 = vld [vmem:[%s243 + $0x4] sm:$0xf]
          %v325 = vld [vmem:[%s243 + $0x8] sm:$0xf]
          %v326 = vld [vmem:[%s243 + $0xc] sm:$0xf]
          %v327 = vld [vmem:[%s243 + $0x10] sm:$0xf]
          %v328 = vld [vmem:[%s243 + $0x14] sm:$0xf]
          %v329 = vld [vmem:[%s243 + $0x18] sm:$0xf]
          %v330 = vld [vmem:[%s243 + $0x1c] sm:$0xf]
          %v331 = vld [vmem:[%s252] sm:$0xf]
          %v332 = vld [vmem:[%s252 + $0x4] sm:$0xf]
          %v333 = vld [vmem:[%s252 + $0x8] sm:$0xf]
          %v334 = vld [vmem:[%s252 + $0xc] sm:$0xf]
          %v335 = vld [vmem:[%s252 + $0x10] sm:$0xf]
          %v336 = vld [vmem:[%s252 + $0x14] sm:$0xf]
          %v337 = vld [vmem:[%s252 + $0x18] sm:$0xf]
          %v338 = vld [vmem:[%s252 + $0x1c] sm:$0xf]
          %v339 = vld [vmem:[%s252 + $0x20] sm:$0xf]
          %v340 = vld [vmem:[%s252 + $0x24] sm:$0xf]
          %v341 = vld [vmem:[%s252 + $0x28] sm:$0xf]
          %v342 = vld [vmem:[%s252 + $0x2c] sm:$0xf]
          %v343 = vld [vmem:[%s252 + $0x30] sm:$0xf]
          %v344 = vld [vmem:[%s252 + $0x34] sm:$0xf]
          %v345 = vld [vmem:[%s252 + $0x38] sm:$0xf]
          %v346 = vld [vmem:[%s252 + $0x3c] sm:$0xf]
          %v355 = vunpack.c.l.b16 %v323
          %v356 = vunpack.c.l.b16 %v324
          %v357 = vunpack.c.l.b16 %v325
          %v358 = vunpack.c.l.b16 %v326
          %v359 = vunpack.c.l.b16 %v327
          %v360 = vunpack.c.l.b16 %v328
          %v361 = vunpack.c.l.b16 %v329
          %v362 = vunpack.c.l.b16 %v330
          %v363 = vpack.c.b16 %v356, %v355
          %v364 = vpack.c.b16 %v358, %v357
          %v365 = vpack.c.b16 %v360, %v359
          %v366 = vpack.c.b16 %v362, %v361
          %v387 = vunpack.c.l.b16 %v331
          %v388 = vunpack.c.l.b16 %v332
          %v389 = vunpack.c.l.b16 %v333
          %v390 = vunpack.c.l.b16 %v334
          %v391 = vunpack.c.l.b16 %v335
          %v392 = vunpack.c.l.b16 %v336
          %v393 = vunpack.c.l.b16 %v337
          %v394 = vunpack.c.l.b16 %v338
          %v395 = vunpack.c.l.b16 %v339
          %v396 = vunpack.c.l.b16 %v340
          %v397 = vunpack.c.l.b16 %v341
          %v398 = vunpack.c.l.b16 %v342
          %v399 = vunpack.c.l.b16 %v343
          %v400 = vunpack.c.l.b16 %v344
          %v401 = vunpack.c.l.b16 %v345
          %v402 = vunpack.c.l.b16 %v346
          %v403 = vpack.c.b16 %v388, %v387
          %v404 = vpack.c.b16 %v390, %v389
          %v405 = vpack.c.b16 %v392, %v391
          %v406 = vpack.c.b16 %v394, %v393
          %v407 = vpack.c.b16 %v396, %v395
          %v408 = vpack.c.b16 %v398, %v397
          %v409 = vpack.c.b16 %v400, %v399
          %v410 = vpack.c.b16 %v402, %v401
          %419 = vmatprep.subr.bf16.mxu0 0
          %420 = vmatpush1.bf16.msra.mxu0 %v403
          %421 = vmatprep.subr.bf16.mxu0 0
          %422 = vmatpush1.bf16.msra.mxu0 %v404
          %423 = vmatprep.subr.bf16.mxu0 0
          %424 = vmatpush1.bf16.msra.mxu0 %v405
          %425 = vmatprep.subr.bf16.mxu0 0
          %426 = vmatpush1.bf16.msra.mxu0 %v406
          %427 = vmatprep.subr.bf16.mxu0 0
          %428 = vmatpush1.bf16.msra.mxu0 %v407
          %429 = vmatprep.subr.bf16.mxu0 0
          %430 = vmatpush1.bf16.msra.mxu0 %v408
          %431 = vmatprep.subr.bf16.mxu0 0
          %432 = vmatpush1.bf16.msra.mxu0 %v409
          %433 = vmatprep.subr.bf16.mxu0 0
          %434 = vmatpush1.bf16.msra.mxu0 %v410
          %435 = vmatprep.subr.bf16.mxu0 0
          %436 = vmatpush1.bf16.msra.mxu0 0
          %437 = vmatprep.subr.bf16.mxu0 0
          %438 = vmatpush1.bf16.msra.mxu0 0
          %439 = vmatprep.subr.bf16.mxu0 0
          %440 = vmatpush1.bf16.msra.mxu0 0
          %441 = vmatprep.subr.bf16.mxu0 0
          %442 = vmatpush1.bf16.msra.mxu0 0
          %443 = vmatprep.subr.bf16.mxu0 0
          %444 = vmatpush1.bf16.msra.mxu0 0
          %445 = vmatprep.subr.bf16.mxu0 0
          %446 = vmatpush1.bf16.msra.mxu0 0
          %447 = vmatprep.subr.bf16.mxu0 0
          %448 = vmatpush1.bf16.msra.mxu0 0
          %449 = vmatprep.subr.bf16.mxu0 0
          %450 = vmatpush1.bf16.msra.mxu0 0
          %451 = vmatprep.mubr.bf16.mxu0 0
          %452 = vmatmul.mubr.bf16.gmra.mrb[0].mxu0 %v363
          %v453 = vpop.f32.mrb[0].mxu0
          %v454 = vadd.f32 0.0, %v453
          %v455 = vpop.f32.mrb[0].mxu0
          %v456 = vpop.f32.mrb[0].mxu0
          %v457 = vadd.f32 0.0, %v456
          %v458 = vpop.f32.mrb[0].mxu0
          %459 = vmatprep.mubr.bf16.mxu0 0
          %460 = vmatmul.mubr.bf16.gmra.mrb[0].mxu0 %v364
          %v461 = vpop.f32.mrb[0].mxu0
          %v462 = vadd.f32 0.0, %v461
          %v463 = vpop.f32.mrb[0].mxu0
          %v464 = vpop.f32.mrb[0].mxu0
          %v465 = vadd.f32 0.0, %v464
          %v466 = vpop.f32.mrb[0].mxu0
          %467 = vmatprep.mubr.bf16.mxu0 0
          %468 = vmatmul.mubr.bf16.gmra.mrb[0].mxu0 %v365
          %v469 = vpop.f32.mrb[0].mxu0
          %v470 = vadd.f32 0.0, %v469
          %v471 = vpop.f32.mrb[0].mxu0
          %v472 = vpop.f32.mrb[0].mxu0
          %v473 = vadd.f32 0.0, %v472
          %v474 = vpop.f32.mrb[0].mxu0
          %475 = vmatprep.mubr.bf16.mxu0 0
          %476 = vmatmul.mubr.bf16.gmra.mrb[0].mxu0 %v366
          %v477 = vpop.f32.mrb[0].mxu0
          %v478 = vadd.f32 0.0, %v477
          %v479 = vpop.f32.mrb[0].mxu0
          %v480 = vpop.f32.mrb[0].mxu0
          %v481 = vadd.f32 0.0, %v480
          %v482 = vpop.f32.mrb[0].mxu0
          %483 = vdwg.mxu0
          %v484 = vadd.f32 %v315, %v454
          %v485 = vadd.f32 %v316, %v457
          %v486 = vadd.f32 %v317, %v462
          %v487 = vadd.f32 %v318, %v465
          %v488 = vadd.f32 %v319, %v470
          %v489 = vadd.f32 %v320, %v473
          %v490 = vadd.f32 %v321, %v478
          %v491 = vadd.f32 %v322, %v481
          %492 = vst [vmem:[#allocation2] sm:$0xff] %v484
          %493 = vst [vmem:[#allocation2 + $0x8] sm:$0xff] %v485
          %494 = vst [vmem:[#allocation2 + $0x10] sm:$0xff] %v486
          %495 = vst [vmem:[#allocation2 + $0x18] sm:$0xff] %v487
          %496 = vst [vmem:[#allocation2 + $0x20] sm:$0xff] %v488
          %497 = vst [vmem:[#allocation2 + $0x28] sm:$0xff] %v489
          %498 = vst [vmem:[#allocation2 + $0x30] sm:$0xff] %v490
          %499 = vst [vmem:[#allocation2 + $0x38] sm:$0xff] %v491
        $region44: #{tpu_custom_call.1} parent=27 // pred_fallthru
          _
        %p500 = scmp.eq.s32.totalorder %s39, 2
        // Predicated region
        $region45: #{tpu_custom_call.1} parent=27 // pred_check
          %p501 = pneg %p500
        $region46: #{tpu_custom_call.1} parent=27 // pred_check_branch
          %503 = sbr.rel (%p501) target = $region48
        $region47: #{tpu_custom_call.1} parent=27 // pred_region
          %v504 = vld [vmem:[#allocation2] sm:$0xff]
          %v505 = vld [vmem:[#allocation2 + $0x8] sm:$0xff]
          %v506 = vld [vmem:[#allocation2 + $0x10] sm:$0xff]
          %v507 = vld [vmem:[#allocation2 + $0x18] sm:$0xff]
          %v508 = vld [vmem:[#allocation2 + $0x20] sm:$0xff]
          %v509 = vld [vmem:[#allocation2 + $0x28] sm:$0xff]
          %v510 = vld [vmem:[#allocation2 + $0x30] sm:$0xff]
          %v511 = vld [vmem:[#allocation2 + $0x38] sm:$0xff]
          %512 = vst [vmem:[%s277] sm:$0xff] %v504
          %513 = vst [vmem:[%s277 + $0x8] sm:$0xff] %v505
          %514 = vst [vmem:[%s277 + $0x10] sm:$0xff] %v506
          %515 = vst [vmem:[%s277 + $0x18] sm:$0xff] %v507
          %516 = vst [vmem:[%s277 + $0x20] sm:$0xff] %v508
          %517 = vst [vmem:[%s277 + $0x28] sm:$0xff] %v509
          %518 = vst [vmem:[%s277 + $0x30] sm:$0xff] %v510
          %519 = vst [vmem:[%s277 + $0x38] sm:$0xff] %v511
        $region48: #{tpu_custom_call.1} parent=27 // pred_fallthru
          _
        %s520 = sand.u32 %s140, 1
        %s521 = scalar_lea.sflag [#allocation8], %s520
        %s522 = sand.u32 %s140, 1
        %s523 = smul.addr %s522, 64
        %s524 = scalar_lea.vmem [#allocation11], %s523
        // Predicated region
        $region49: #{tpu_custom_call.1} parent=27 // pred_check
          %p525 = pneg %p150
        $region50: #{tpu_custom_call.1} parent=27 // pred_check_branch
          %527 = sbr.rel (%p525) target = $region52
        $region51: #{tpu_custom_call.1} parent=27 // pred_region
          %s528 = smul.u32 8, %s38
          %s530 = ssub.s32 1024, 1024
          %531 = vsyncadd %s521, %s530
          %s532 = smul.addr %s528, 128
          %s533 = scalar_lea.hbm %s4, %s532
          %s534 = sshll.u32 %s524, 4
          %s535 = int_to_ptr.vmem [resolvable:$true] %s534
          %540 = dma.vmem_to_hbm [thread:$0]  %s535, 1024, %s533, %s521, 128, 128, 8
        $region52: #{tpu_custom_call.1} parent=27 // pred_fallthru
          _
      $region28: #{tpu_custom_call.1} parent=5 // pred_fallthru
        _
      %p541 = scmp.le.s32.totalorder 2, %s29
      // Predicated region
      $region53: #{tpu_custom_call.1} parent=5 // pred_check
        %p542 = pneg %p541
      $region54: #{tpu_custom_call.1} parent=5 // pred_check_branch
        %544 = sbr.rel (%p542) target = $region56
      $region55: #{tpu_custom_call.1} parent=5 // pred_region
        %s545 = ssub.s32 %s29, 2
        // Predicated region
        $region57: #{tpu_custom_call.1} parent=55 // pred_check
          %p546 = pneg %p156
        $region58: #{tpu_custom_call.1} parent=55 // pred_check_branch
          %548 = sbr.rel (%p546) target = $region60
        $region59: #{tpu_custom_call.1} parent=55 // pred_region
          %s549 = sand.u32 %s141, 1
          %s550 = scalar_lea.sflag [#allocation8], %s549
          %s551 = sand.u32 %s141, 1
          %s552 = smul.addr %s551, 64
          %s553 = scalar_lea.vmem [#allocation11], %s552
          %554 = dma.done %s550, 1024
        $region60: #{tpu_custom_call.1} parent=55 // pred_fallthru
          _
      $region56: #{tpu_custom_call.1} parent=5 // pred_fallthru
        _
    $region6: #{tpu_custom_call.1} parent=1 // loop_footer
      %s33 = sadd.s32 1, %s29
    $region7: #{tpu_custom_call.1} parent=1 // loop_footer_branch
      %28 = sbr.rel target = $region3
    $region8: #{tpu_custom_call.1} parent=1 // loop_exit
      _
    %555 = vsyncpa [#allocation7], 1
    %s556 = scalar_lea.sflag [#allocation7], 1
    %557 = vsyncpa %s556, 1
    %558 = vsyncpa [#allocation10], 1
    %s559 = scalar_lea.sflag [#allocation10], 1
    %560 = vsyncpa %s559, 1
    %561 = vsyncpa [#allocation8], 1
    %s562 = scalar_lea.sflag [#allocation8], 1
    %563 = vsyncpa %s562, 1

</llo_original>
